<compile_context>
chip_gen: v7x
topology: tpu7x:2x2x1
jax: 0.10.0
libtpu: 0.0.40
codegen_flags: <defaults>
</compile_context>

<pallas_src>
import math

import jax
import jax.numpy as jnp
from jax.experimental import pallas as pl
from jax.experimental.pallas import tpu as pltpu


def _round_up(x: int, m: int) -> int:
    return ((x + m - 1) // m) * m


def _word_pos_kernel(wid_ref, pid_ref, wtab_ref, ptab_ref, out_ref):
    """out[t] = word_table[wid[t]] + pos_table[min(pid[t], P-1)] for one TM block."""
    tm = out_ref.shape[0]
    num_words = wtab_ref.shape[0]
    num_pos = ptab_ref.shape[0]

    wids = wid_ref[...]                                    # (tm, 1) int32
    pids = jnp.minimum(pid_ref[...], num_pos - 1)          # clamp_max(max_position - 1)

    w_onehot = (wids == jax.lax.broadcasted_iota(jnp.int32, (tm, num_words), 1)
                ).astype(wtab_ref.dtype)                   # (tm, V)
    p_onehot = (pids == jax.lax.broadcasted_iota(jnp.int32, (tm, num_pos), 1)
                ).astype(ptab_ref.dtype)                   # (tm, P)

    acc = jnp.dot(w_onehot, wtab_ref[...], preferred_element_type=jnp.float32)
    acc = acc + jnp.dot(p_onehot, ptab_ref[...], preferred_element_type=jnp.float32)
    out_ref[...] = acc.astype(out_ref.dtype)


def _word_only_kernel(wid_ref, wtab_ref, out_ref):
    """out[t] = word_table[wid[t]] for one TM block (position_ids=None path)."""
    tm = out_ref.shape[0]
    num_words = wtab_ref.shape[0]
    wids = wid_ref[...]                                    # (tm, 1) int32
    w_onehot = (wids == jax.lax.broadcasted_iota(jnp.int32, (tm, num_words), 1)
                ).astype(wtab_ref.dtype)
    out_ref[...] = jnp.dot(w_onehot, wtab_ref[...],
                           preferred_element_type=jnp.float32).astype(out_ref.dtype)


def seq_gnn_node_embedding(word_table, pos_table, input_ids, position_ids=None,
                           *, add_position=True, block_tm=512):
    """Pallas equivalent of SeqGNNNodeEmbedding.forward."""
    vocab, dim = word_table.shape
    orig_shape = input_ids.shape

    flat_w = input_ids.reshape(-1).astype(jnp.int32)
    n = flat_w.shape[0]
    if n == 0:  # empty index tensor: avoid grid=(0,)
        return jnp.zeros(orig_shape + (dim,), dtype=word_table.dtype)

    # TM: multiple of 8 (sublane-dense f32 output), capped by the index count.
    tm = max(8, min(block_tm, _round_up(n, 8)))
    n_pad = _round_up(n, tm)
    pad = n_pad - n
    w_ids = jnp.pad(flat_w, (0, pad)).reshape(n_pad, 1)    # pad with valid index 0

    use_pos = add_position and (position_ids is not None)
    grid = (n_pad // tm,)
    cparams = pltpu.CompilerParams(dimension_semantics=("parallel",))
    out_shape = jax.ShapeDtypeStruct((n_pad, dim), word_table.dtype)
    out_spec = pl.BlockSpec((tm, dim), lambda i: (i, 0))

    # TODO(synk): for vocabularies too large to keep VMEM-resident (real
    # pretrained word2vec tables), switch the word table to memory_space=pl.ANY
    # with scalar-prefetch-driven row DMAs instead of the one-hot MXU gather.
    if use_pos:
        max_pos, pdim = pos_table.shape
        assert pdim == dim
        flat_p = position_ids.reshape(-1).astype(jnp.int32)
        p_ids = jnp.pad(flat_p, (0, pad)).reshape(n_pad, 1)
        grid_spec = pltpu.PrefetchScalarGridSpec(
            num_scalar_prefetch=0,
            grid=grid,
            in_specs=[
                pl.BlockSpec((tm, 1), lambda i: (i, 0)),         # word ids
                pl.BlockSpec((tm, 1), lambda i: (i, 0)),         # position ids
                pl.BlockSpec((vocab, dim), lambda i: (0, 0)),    # word table (resident)
                pl.BlockSpec((max_pos, dim), lambda i: (0, 0)),  # pos table (resident)
            ],
            out_specs=out_spec,
        )
        out = pl.pallas_call(
            _word_pos_kernel, out_shape=out_shape,
            grid_spec=grid_spec, compiler_params=cparams,
        )(w_ids, p_ids, word_table, pos_table)
    else:
        grid_spec = pltpu.PrefetchScalarGridSpec(
            num_scalar_prefetch=0,
            grid=grid,
            in_specs=[
                pl.BlockSpec((tm, 1), lambda i: (i, 0)),         # word ids
                pl.BlockSpec((vocab, dim), lambda i: (0, 0)),    # word table (resident)
            ],
            out_specs=out_spec,
        )
        out = pl.pallas_call(
            _word_only_kernel, out_shape=out_shape,
            grid_spec=grid_spec, compiler_params=cparams,
        )(w_ids, word_table)

    return out[:n].reshape(orig_shape + (dim,))


def sin_cos_position_table(max_position: int, hidden_dim: int) -> jax.Array:
    """Mirrors PositionEmbedding.sin_cos_position_initial (gain = 2/(5*hidden))."""
    position = jnp.arange(max_position, dtype=jnp.float32)[:, None]
    div_term = jnp.exp(jnp.arange(0, hidden_dim, 2, dtype=jnp.float32)
                       * (-math.log(10000.0) / hidden_dim))
    gain = 2.0 / (hidden_dim + 4.0 * hidden_dim)
    pe = jnp.zeros((max_position, hidden_dim), dtype=jnp.float32)
    pe = pe.at[:, 0::2].set(jnp.sin(position * div_term) * gain)
    pe = pe.at[:, 1::2].set(jnp.cos(position * div_term) * gain)
    return pe


def make_word_table(vocab_size: int, hidden_dim: int, key) -> jax.Array:
    """Deterministic stand-in for the (file-loaded) pretrained word2vec table."""
    return 0.01 * jax.random.normal(key, (vocab_size, hidden_dim), dtype=jnp.float32)


if __name__ == "__main__":
    key = jax.random.PRNGKey(0)
    k_tab, k_ids = jax.random.split(key)

    # Small shapes consistent with the module (hidden dim kept lane-aligned).
    vocab_size, max_position, hidden_dim = 32, 64, 128
    batch, seq = 2, 8

    word_table = make_word_table(vocab_size, hidden_dim, k_tab)
    pos_table = sin_cos_position_table(max_position, hidden_dim)

    input_ids = jax.random.randint(k_ids, (batch, seq), 0, vocab_size, dtype=jnp.int32)
    position_ids = jnp.broadcast_to(jnp.arange(seq, dtype=jnp.int32), (batch, seq))

    # Full forward: word embedding + position embedding.
    out = seq_gnn_node_embedding(word_table, pos_table, input_ids, position_ids)
    out = jax.block_until_ready(out)

    ref = word_table[input_ids] + pos_table[jnp.minimum(position_ids, max_position - 1)]
    assert out.shape == (batch, seq, hidden_dim)
    assert jnp.allclose(out, ref, atol=1e-5, rtol=1e-5), "mismatch vs reference (word+pos)"

    # Word-only path (position_ids=None).
    out_w = seq_gnn_node_embedding(word_table, pos_table, input_ids, None)
    out_w = jax.block_until_ready(out_w)
    assert jnp.allclose(out_w, word_table[input_ids], atol=1e-5, rtol=1e-5), \
        "mismatch vs reference (word only)"

    print("KERNEL_OK")
</pallas_src>

<mosaic_0001>
module attributes {stable_mosaic.version = 11 : i64} {
  func.func @_word_pos_kernel(%arg0: i32, %arg1: memref<16x1xi32, #tpu.memory_space<vmem>>, %arg2: memref<16x1xi32, #tpu.memory_space<vmem>>, %arg3: memref<32x128xf32, #tpu.memory_space<vmem>>, %arg4: memref<64x128xf32, #tpu.memory_space<vmem>>, %arg5: memref<16x128xf32, #tpu.memory_space<vmem>>) attributes {dimension_semantics = [#tpu.dimension_semantics<parallel>], iteration_bounds = array<i64: 1>, scalar_prefetch = 0 : i64, scratch_operands = 0 : i64, tpu.core_type = #tpu.core_type<tc>, window_params = [{transform_indices = @transform_0, window_bounds = array<i64: 16, 1>}, {transform_indices = @transform_1, window_bounds = array<i64: 16, 1>}, {pipeline_mode = #tpu.pipeline_mode<synchronous>, transform_indices = @transform_2, window_bounds = array<i64: 32, 128>}, {pipeline_mode = #tpu.pipeline_mode<synchronous>, transform_indices = @transform_3, window_bounds = array<i64: 64, 128>}, {transform_indices = @transform_4, window_bounds = array<i64: 16, 128>}]} {
    %c0 = arith.constant 0 : index
    %c0_0 = arith.constant 0 : index
    %0 = vector.load %arg1[%c0, %c0_0] : memref<16x1xi32, #tpu.memory_space<vmem>>, vector<16x1xi32>
    %c0_1 = arith.constant 0 : index
    %c0_2 = arith.constant 0 : index
    %1 = vector.load %arg2[%c0_1, %c0_2] : memref<16x1xi32, #tpu.memory_space<vmem>>, vector<16x1xi32>
    %c63_i32 = arith.constant 63 : i32
    %2 = vector.broadcast %c63_i32 : i32 to vector<16x1xi32>
    %3 = arith.minsi %1, %2 : vector<16x1xi32>
    %4 = tpu.iota {dimensions = array<i32: 1>} : vector<16x32xi32>
    %5 = vector.broadcast %0 : vector<16x1xi32> to vector<16x32xi32>
    %6 = arith.cmpi eq, %5, %4 : vector<16x32xi32>
    %7 = arith.extui %6 : vector<16x32xi1> to vector<16x32xi32>
    %8 = arith.sitofp %7 : vector<16x32xi32> to vector<16x32xf32>
    %9 = tpu.iota {dimensions = array<i32: 1>} : vector<16x64xi32>
    %10 = vector.broadcast %3 : vector<16x1xi32> to vector<16x64xi32>
    %11 = arith.cmpi eq, %10, %9 : vector<16x64xi32>
    %12 = arith.extui %11 : vector<16x64xi1> to vector<16x64xi32>
    %13 = arith.sitofp %12 : vector<16x64xi32> to vector<16x64xf32>
    %c0_3 = arith.constant 0 : index
    %c0_4 = arith.constant 0 : index
    %14 = vector.load %arg3[%c0_3, %c0_4] : memref<32x128xf32, #tpu.memory_space<vmem>>, vector<32x128xf32>
    %cst = arith.constant dense<0.000000e+00> : vector<16x128xf32>
    %15 = tpu.matmul %8, %14, %cst {dimension_numbers = #tpu.dot_dimension_numbers<[1], [0], [0], [1], [0, 0, 1, 1], [], []>} : vector<16x32xf32>, vector<32x128xf32>, vector<16x128xf32> -> vector<16x128xf32>
    %c0_5 = arith.constant 0 : index
    %c0_6 = arith.constant 0 : index
    %16 = vector.load %arg4[%c0_5, %c0_6] : memref<64x128xf32, #tpu.memory_space<vmem>>, vector<64x128xf32>
    %cst_7 = arith.constant dense<0.000000e+00> : vector<16x128xf32>
    %17 = tpu.matmul %13, %16, %cst_7 {dimension_numbers = #tpu.dot_dimension_numbers<[1], [0], [0], [1], [0, 0, 1, 1], [], []>} : vector<16x64xf32>, vector<64x128xf32>, vector<16x128xf32> -> vector<16x128xf32>
    %18 = arith.addf %15, %17 : vector<16x128xf32>
    %c0_8 = arith.constant 0 : index
    %c0_9 = arith.constant 0 : index
    %19 = vector.load %arg5[%c0_8, %c0_9] : memref<16x128xf32, #tpu.memory_space<vmem>>, vector<16x128xf32>
    tpu.vector_store %arg5[%c0_8, %c0_9], %18 {strides = array<i32>} : memref<16x128xf32, #tpu.memory_space<vmem>>, vector<16x128xf32>,
    return
  }
  func.func @transform_0(%arg0: i32) -> (i32, i32) {
    %c0_i32 = arith.constant 0 : i32
    %c0_i32_0 = arith.constant 0 : i32
    return %arg0, %c0_i32 : i32, i32
  }
  func.func @transform_1(%arg0: i32) -> (i32, i32) {
    %c0_i32 = arith.constant 0 : i32
    %c0_i32_0 = arith.constant 0 : i32
    return %arg0, %c0_i32 : i32, i32
  }
  func.func @transform_2(%arg0: i32) -> (i32, i32) {
    %c0_i32 = arith.constant 0 : i32
    %c0_i32_0 = arith.constant 0 : i32
    %c0_i32_1 = arith.constant 0 : i32
    return %c0_i32, %c0_i32_0 : i32, i32
  }
  func.func @transform_3(%arg0: i32) -> (i32, i32) {
    %c0_i32 = arith.constant 0 : i32
    %c0_i32_0 = arith.constant 0 : i32
    %c0_i32_1 = arith.constant 0 : i32
    return %c0_i32, %c0_i32_0 : i32, i32
  }
  func.func @transform_4(%arg0: i32) -> (i32, i32) {
    %c0_i32 = arith.constant 0 : i32
    %c0_i32_0 = arith.constant 0 : i32
    return %arg0, %c0_i32 : i32, i32
  }
}

</mosaic_0001>

<llo_original>
// kernel: tpu_custom_call.1
$region0: #{tpu_custom_call.1}
  #allocation0 [shape = 'u32[]', space=smem, size = 0x4, offset = 0x4, fixed_abs, tag = 'smem constant byte address 0x4 - core index']
  #allocation1 [shape = 'u32[144,128]{1,0:T(1,128)}', space=vmem, size = 0x12000, scoped, tag = 'internal scratch']
  %s0 = inlined_call_operand.vmem [shape: s32[16,1], index: 0, kind: input, shape index: {}]
  %s1 = inlined_call_operand.vmem [shape: s32[16,1], index: 1, kind: input, shape index: {}]
  %s2 = inlined_call_operand.vmem [shape: f32[32,128], index: 2, kind: input, shape index: {}]
  %s3 = inlined_call_operand.hbm [shape: f32[64,128], index: 3, kind: input, shape index: {}]
  %s4 = inlined_call_operand.hbm [shape: f32[16,128], index: 4, kind: output, shape index: {}]
  %s5 = sld [smem:[#allocation0]]
  $region30: #{tpu_custom_call.1} parent=0
    _
  %s7 = ssub.s32 1, %s5
  %s8 = scalar_select 0, %s7, %s5
  $region1: #{tpu_custom_call.1} parent=0
    #allocation2 [shape = 'u8[32768]{0}', space=vmem, size = 0x8000, scoped, tag = 'input window, operand 3, single buffered']
    #allocation3 [shape = 's32[1]{0}', space=sflag, size = 0x4, scoped, tag = 'scoped memory for tpu_custom_call.1']
    #allocation4 [shape = 's32[1]{0}', space=sflag, size = 0x4, scoped, tag = 'scoped memory for tpu_custom_call.1']
    #allocation5 [shape = 'u8[8192]{0}', space=vmem, size = 0x2000, scoped, tag = 'output window, operand 0, single buffered']
    %9 = vsyncpa [#allocation3], 0
    %10 = vsyncpa [#allocation4], 0
    // Predicated region
    $region2: #{tpu_custom_call.1} parent=1 // pred_check
      _
    $region3: #{tpu_custom_call.1} parent=1 // pred_check_branch
      %12 = sbr.rel (0) target = $region5
    $region4: #{tpu_custom_call.1} parent=1 // pred_region
      _
    $region5: #{tpu_custom_call.1} parent=1 // pred_fallthru
      _
    // Predicated region
    $region6: #{tpu_custom_call.1} parent=1 // pred_check
      _
    $region7: #{tpu_custom_call.1} parent=1 // pred_check_branch
      %14 = sbr.rel (0) target = $region9
    $region8: #{tpu_custom_call.1} parent=1 // pred_region
      _
    $region9: #{tpu_custom_call.1} parent=1 // pred_fallthru
      _
    // Predicated region
    $region10: #{tpu_custom_call.1} parent=1 // pred_check
      _
    $region11: #{tpu_custom_call.1} parent=1 // pred_check_branch
      %16 = sbr.rel (0) target = $region13
    $region12: #{tpu_custom_call.1} parent=1 // pred_region
      _
    $region13: #{tpu_custom_call.1} parent=1 // pred_fallthru
      _
    // Predicated region
    $region14: #{tpu_custom_call.1} parent=1 // pred_check
      _
    $region15: #{tpu_custom_call.1} parent=1 // pred_check_branch
      %18 = sbr.rel (0) target = $region17
    $region16: #{tpu_custom_call.1} parent=1 // pred_region
      %s20 = ssub.s32 1024, 1024
      %21 = vsyncadd [#allocation3], %s20
      %s22 = sshll.u32 [#allocation2], 4
      %s23 = int_to_ptr.vmem [resolvable:$true] %s22
      %28 = dma.hbm_to_vmem [thread:$0]  %s3, 1024, %s23, [#allocation3], 128, 128, 8
    $region17: #{tpu_custom_call.1} parent=1 // pred_fallthru
      _
    // Predicated region
    $region18: #{tpu_custom_call.1} parent=1 // pred_check
      _
    $region19: #{tpu_custom_call.1} parent=1 // pred_check_branch
      %30 = sbr.rel (0) target = $region21
    $region20: #{tpu_custom_call.1} parent=1 // pred_region
      %31 = dma.done [#allocation3], 1024
    $region21: #{tpu_custom_call.1} parent=1 // pred_fallthru
      _
    %v32 = vld [vmem:[%s0] sm:$0xff]
    %v33 = vld [vmem:[%s0 + $0x8] sm:$0xff]
    %v34 = vld [vmem:[%s1] sm:$0xff]
    %v35 = vld [vmem:[%s1 + $0x8] sm:$0xff]
    %vm36 = vcmp.lt.s32.totalorder %v34, 63
    %v37 = vsel %vm36, %v34, 63
    %vm38 = vcmp.lt.s32.totalorder %v35, 63
    %v39 = vsel %vm38, %v35, 63
    %v40 = vlaneseq
    %v41 = vand.u32 %v40, 127
    %42 = vset.pattern.permute.xlu0 0
    %43 = vperm.xlu0 %42, %v32
    %v44 = vpop.permute.xlu0 %43
    %45 = vset.pattern.permute.xlu0 0
    %46 = vperm.xlu0 %45, %v33
    %v47 = vpop.permute.xlu0 %46
    %vm48 = vcmp.eq.s32.totalorder %v44, %v41
    %vm49 = vcmp.eq.s32.totalorder %v47, %v41
    %v50 = vsel %vm48, 1, 0
    %v51 = vsel %vm49, 1, 0
    %v52 = vcvt.s32.f32 %v50
    %v53 = vcvt.s32.f32 %v51
    %54 = vset.pattern.permute.xlu0 0
    %55 = vperm.xlu0 %54, %v37
    %v56 = vpop.permute.xlu0 %55
    %57 = vset.pattern.permute.xlu0 0
    %58 = vperm.xlu0 %57, %v39
    %v59 = vpop.permute.xlu0 %58
    %vm60 = vcmp.eq.s32.totalorder %v56, %v41
    %vm61 = vcmp.eq.s32.totalorder %v59, %v41
    %v62 = vsel %vm60, 1, 0
    %v63 = vsel %vm61, 1, 0
    %v64 = vcvt.s32.f32 %v62
    %v65 = vcvt.s32.f32 %v63
    %v66 = vld [vmem:[%s2] sm:$0xff]
    %v67 = vld [vmem:[%s2 + $0x8] sm:$0xff]
    %v68 = vld [vmem:[%s2 + $0x10] sm:$0xff]
    %v69 = vld [vmem:[%s2 + $0x18] sm:$0xff]
    %v70 = vld [vmem:[#allocation2] sm:$0xff]
    %v71 = vld [vmem:[#allocation2 + $0x8] sm:$0xff]
    %v72 = vld [vmem:[#allocation2 + $0x10] sm:$0xff]
    %v73 = vld [vmem:[#allocation2 + $0x18] sm:$0xff]
    %v74 = vld [vmem:[#allocation2 + $0x20] sm:$0xff]
    %v75 = vld [vmem:[#allocation2 + $0x28] sm:$0xff]
    %v76 = vld [vmem:[#allocation2 + $0x30] sm:$0xff]
    %v77 = vld [vmem:[#allocation2 + $0x38] sm:$0xff]
    %vm78 = vcmask 523264
    %v80 = vsel %vm78, %v64, 0
    %v83 = vsel %vm78, %v65, 0
    %85 = vmatprep.subr.mxu0 0.0
    %86 = vmatpush1.msra.mxu0 %v70
    %87 = vmatprep.subr.mxu0 0.0
    %88 = vmatpush1.msra.mxu0 %v71
    %89 = vmatprep.subr.mxu0 0.0
    %90 = vmatpush1.msra.mxu0 %v72
    %91 = vmatprep.subr.mxu0 0.0
    %92 = vmatpush1.msra.mxu0 %v73
    %93 = vmatprep.subr.mxu0 0.0
    %94 = vmatpush1.msra.mxu0 %v74
    %95 = vmatprep.subr.mxu0 0.0
    %96 = vmatpush1.msra.mxu0 %v75
    %97 = vmatprep.subr.mxu0 0.0
    %98 = vmatpush1.msra.mxu0 %v76
    %99 = vmatprep.subr.mxu0 0.0
    %100 = vmatpush1.msra.mxu0 %v77
    %101 = vmatprep.subr.mxu0 0.0
    %102 = vmatpush1.msra.mxu0 0.0
    %103 = vmatprep.subr.mxu0 0.0
    %104 = vmatpush1.msra.mxu0 0.0
    %105 = vmatprep.subr.mxu0 0.0
    %106 = vmatpush1.msra.mxu0 0.0
    %107 = vmatprep.subr.mxu0 0.0
    %108 = vmatpush1.msra.mxu0 0.0
    %109 = vmatprep.subr.mxu0 0.0
    %110 = vmatpush1.msra.mxu0 0.0
    %111 = vmatprep.subr.mxu0 0.0
    %112 = vmatpush1.msra.mxu0 0.0
    %113 = vmatprep.subr.mxu0 0.0
    %114 = vmatpush1.msra.mxu0 0.0
    %115 = vmatprep.subr.mxu0 0.0
    %116 = vmatpush1.msra.mxu0 0.0
    %117 = vmatprep.subr.mxu0 0.0
    %118 = vmatpush1.msra.mxu0 0.0
    %119 = vmatprep.subr.mxu0 0.0
    %120 = vmatpush1.msra.mxu0 0.0
    %121 = vmatprep.subr.mxu0 0.0
    %122 = vmatpush1.msra.mxu0 0.0
    %123 = vmatprep.subr.mxu0 0.0
    %124 = vmatpush1.msra.mxu0 0.0
    %125 = vmatprep.subr.mxu0 0.0
    %126 = vmatpush1.msra.mxu0 0.0
    %127 = vmatprep.subr.mxu0 0.0
    %128 = vmatpush1.msra.mxu0 0.0
    %129 = vmatprep.subr.mxu0 0.0
    %130 = vmatpush1.msra.mxu0 0.0
    %131 = vmatprep.subr.mxu0 0.0
    %132 = vmatpush1.msra.mxu0 0.0
    %133 = vmatprep.subr.mxu0 0.0
    %134 = vmatpush1.msra.mxu0 0.0
    %135 = vmatprep.subr.mxu0 0.0
    %136 = vmatpush1.msra.mxu0 0.0
    %137 = vmatprep.subr.mxu0 0.0
    %138 = vmatpush1.msra.mxu0 0.0
    %139 = vmatprep.subr.mxu0 0.0
    %140 = vmatpush1.msra.mxu0 0.0
    %141 = vmatprep.subr.mxu0 0.0
    %142 = vmatpush1.msra.mxu0 0.0
    %143 = vmatprep.subr.mxu0 0.0
    %144 = vmatpush1.msra.mxu0 0.0
    %145 = vmatprep.subr.mxu0 0.0
    %146 = vmatpush1.msra.mxu0 0.0
    %147 = vmatprep.subr.mxu0 0.0
    %148 = vmatpush1.msra.mxu0 0.0
    %149 = vmatprep.mubr.f32.mxu0 0.0
    %150 = vmatmul.mubr.f32.gmra.mrb[0].mxu0 %v80
    %v151 = vpop.f32.mrb[0].mxu0
    %v152 = vadd.f32 0.0, %v151
    %v153 = vpop.f32.mrb[0].mxu0
    %154 = vmatprep.mubr.f32.mxu0 0.0
    %155 = vmatmul.mubr.f32.gmra.mrb[0].mxu0 %v83
    %v156 = vpop.f32.mrb[0].mxu0
    %v157 = vadd.f32 0.0, %v156
    %v158 = vpop.f32.mrb[0].mxu0
    %159 = vdwg.mxu0
    %vm160 = vcmask 261120
    %v162 = vsel %vm160, %v52, 0
    %v165 = vsel %vm160, %v53, 0
    %167 = vmatprep.subr.mxu0 0.0
    %168 = vmatpush1.msra.mxu0 %v66
    %169 = vmatprep.subr.mxu0 0.0
    %170 = vmatpush1.msra.mxu0 %v67
    %171 = vmatprep.subr.mxu0 0.0
    %172 = vmatpush1.msra.mxu0 %v68
    %173 = vmatprep.subr.mxu0 0.0
    %174 = vmatpush1.msra.mxu0 %v69
    %175 = vmatprep.subr.mxu0 0.0
    %176 = vmatpush1.msra.mxu0 0.0
    %177 = vmatprep.subr.mxu0 0.0
    %178 = vmatpush1.msra.mxu0 0.0
    %179 = vmatprep.subr.mxu0 0.0
    %180 = vmatpush1.msra.mxu0 0.0
    %181 = vmatprep.subr.mxu0 0.0
    %182 = vmatpush1.msra.mxu0 0.0
    %183 = vmatprep.subr.mxu0 0.0
    %184 = vmatpush1.msra.mxu0 0.0
    %185 = vmatprep.subr.mxu0 0.0
    %186 = vmatpush1.msra.mxu0 0.0
    %187 = vmatprep.subr.mxu0 0.0
    %188 = vmatpush1.msra.mxu0 0.0
    %189 = vmatprep.subr.mxu0 0.0
    %190 = vmatpush1.msra.mxu0 0.0
    %191 = vmatprep.subr.mxu0 0.0
    %192 = vmatpush1.msra.mxu0 0.0
    %193 = vmatprep.subr.mxu0 0.0
    %194 = vmatpush1.msra.mxu0 0.0
    %195 = vmatprep.subr.mxu0 0.0
    %196 = vmatpush1.msra.mxu0 0.0
    %197 = vmatprep.subr.mxu0 0.0
    %198 = vmatpush1.msra.mxu0 0.0
    %199 = vmatprep.subr.mxu0 0.0
    %200 = vmatpush1.msra.mxu0 0.0
    %201 = vmatprep.subr.mxu0 0.0
    %202 = vmatpush1.msra.mxu0 0.0
    %203 = vmatprep.subr.mxu0 0.0
    %204 = vmatpush1.msra.mxu0 0.0
    %205 = vmatprep.subr.mxu0 0.0
    %206 = vmatpush1.msra.mxu0 0.0
    %207 = vmatprep.subr.mxu0 0.0
    %208 = vmatpush1.msra.mxu0 0.0
    %209 = vmatprep.subr.mxu0 0.0
    %210 = vmatpush1.msra.mxu0 0.0
    %211 = vmatprep.subr.mxu0 0.0
    %212 = vmatpush1.msra.mxu0 0.0
    %213 = vmatprep.subr.mxu0 0.0
    %214 = vmatpush1.msra.mxu0 0.0
    %215 = vmatprep.subr.mxu0 0.0
    %216 = vmatpush1.msra.mxu0 0.0
    %217 = vmatprep.subr.mxu0 0.0
    %218 = vmatpush1.msra.mxu0 0.0
    %219 = vmatprep.subr.mxu0 0.0
    %220 = vmatpush1.msra.mxu0 0.0
    %221 = vmatprep.subr.mxu0 0.0
    %222 = vmatpush1.msra.mxu0 0.0
    %223 = vmatprep.subr.mxu0 0.0
    %224 = vmatpush1.msra.mxu0 0.0
    %225 = vmatprep.subr.mxu0 0.0
    %226 = vmatpush1.msra.mxu0 0.0
    %227 = vmatprep.subr.mxu0 0.0
    %228 = vmatpush1.msra.mxu0 0.0
    %229 = vmatprep.subr.mxu0 0.0
    %230 = vmatpush1.msra.mxu0 0.0
    %231 = vmatprep.mubr.f32.mxu0 0.0
    %232 = vmatmul.mubr.f32.gmra.mrb[0].mxu0 %v162
    %v233 = vpop.f32.mrb[0].mxu0
    %v234 = vadd.f32 %v152, %v233
    %v235 = vpop.f32.mrb[0].mxu0
    %236 = vmatprep.mubr.f32.mxu0 0.0
    %237 = vmatmul.mubr.f32.gmra.mrb[0].mxu0 %v165
    %v238 = vpop.f32.mrb[0].mxu0
    %v239 = vadd.f32 %v157, %v238
    %v240 = vpop.f32.mrb[0].mxu0
    %241 = vdwg.mxu0
    %242 = vst [vmem:[#allocation5] sm:$0xff] %v234
    %243 = vst [vmem:[#allocation5 + $0x8] sm:$0xff] %v239
    // Predicated region
    $region22: #{tpu_custom_call.1} parent=1 // pred_check
      _
    $region23: #{tpu_custom_call.1} parent=1 // pred_check_branch
      %245 = sbr.rel (0) target = $region25
    $region24: #{tpu_custom_call.1} parent=1 // pred_region
      %s247 = ssub.s32 256, 256
      %248 = vsyncadd [#allocation4], %s247
      %s249 = sshll.u32 [#allocation5], 4
      %s250 = int_to_ptr.vmem [resolvable:$true] %s249
      %255 = dma.vmem_to_hbm [thread:$0]  %s250, 256, %s4, [#allocation4], 128, 128, 8
    $region25: #{tpu_custom_call.1} parent=1 // pred_fallthru
      _
    // Predicated region
    $region26: #{tpu_custom_call.1} parent=1 // pred_check
      _
    $region27: #{tpu_custom_call.1} parent=1 // pred_check_branch
      %257 = sbr.rel (0) target = $region29
    $region28: #{tpu_custom_call.1} parent=1 // pred_region
      %258 = dma.done [#allocation4], 256
    $region29: #{tpu_custom_call.1} parent=1 // pred_fallthru
      _
    %259 = vsyncpa [#allocation3], 1
    %260 = vsyncpa [#allocation4], 1

</llo_original>
